<compile_context>
chip_gen: v6e
topology: v6e:2x2x1
jax: 0.10.0
libtpu: 0.0.40
codegen_flags: <defaults>
</compile_context>

<pallas_src>
import functools

import jax
import jax.numpy as jnp
from jax.experimental import pallas as pl
from jax.experimental.pallas import tpu as pltpu


def _sliding_window_sum(xpv, kernel_size, C, T):
    """Sum of `kernel_size` consecutive timesteps of the padded series.

    xpv: (rows, Tp*C) with Tp = T + kernel_size - 1, channels fastest on lanes.
    Returns (rows, T*C): out[:, t*C + c] = sum_{j<K} xpv[:, (t+j)*C + c].

    Binary-doubling form: D holds partial window sums of length m (a power of
    two); set bits of K are consumed as soon as their power is available, which
    keeps only ~3 tile-sized temporaries live.
    """
    K = kernel_size
    Tp = T + K - 1
    acc = None
    offset = 0          # timesteps of the final window already accumulated
    m = 1               # current partial-window length (power of two)
    D = xpv             # D[:, t*C+c] = sum_{j<m} xpv[:, (t+j)*C+c]
    n = Tp              # number of valid start positions in D
    while True:
        if K & m:
            piece = D[:, offset * C:(offset + T) * C]
            acc = piece if acc is None else acc + piece
            offset += m
        if 2 * m > K:
            break
        n2 = n - m
        D = D[:, :n2 * C] + D[:, m * C:(m + n2) * C]
        n, m = n2, 2 * m
    return acc


def _decomp_kernel(x_ref, res_ref, mean_ref, xp_ref, *, kernel_size, pad, C, L):
    """x_ref: (rows, L*C) block. Moving average along time (= lane shifts of C)."""
    Lc = L * C
    x = x_ref[...]
    # f32 accumulation only when the input is narrower than 32 bits
    # (mandatory on v5e's non-bf16 VPU, free accuracy elsewhere).
    acc_dtype = jnp.float32 if jnp.dtype(x.dtype).itemsize < 4 else x.dtype
    xf = x.astype(acc_dtype)

    if pad > 0:
        # Stage the edge-replicated padded series in VMEM scratch: one body
        # store + 2*pad tiny edge stores (load/store slots) instead of a
        # lane-misaligned jnp.concatenate (XLU/VPU select-heavy copy).
        xp_ref[:, pad * C:pad * C + Lc] = xf
        first = xf[:, 0:C]
        last = xf[:, Lc - C:Lc]
        for j in range(pad):
            xp_ref[:, j * C:(j + 1) * C] = first
            xp_ref[:, Lc + (pad + j) * C:Lc + (pad + j + 1) * C] = last
        xpv = xp_ref[...]
    else:
        xpv = xf

    window_sum = _sliding_window_sum(xpv, kernel_size, C, L)
    mean = window_sum * (1.0 / kernel_size)
    mean_ref[...] = mean.astype(mean_ref.dtype)
    res_ref[...] = (xf - mean).astype(res_ref.dtype)


def _pick_block_rows(B, Lc, padded_lanes, itemsize, vmem_limit_bytes):
    """Largest legal row block whose full VMEM footprint fits the budget.

    Row granularity follows the native sublane packing of the I/O dtype
    (f32: 8, bf16: 16, int8/fp8: 32 rows) so tile loads/stores stay unmasked.
    The last grid block may be ragged (handled by a cdiv grid).
    """
    granule = 8 * (4 // itemsize)
    acc_itemsize = 4 if itemsize < 4 else itemsize
    per_row = (
        3 * 2 * Lc * itemsize              # in + 2 out streams, double-buffered
        + padded_lanes * acc_itemsize      # padded-series VMEM scratch
        + 4 * Lc * acc_itemsize            # live f32 temporaries of the window sum
    )
    budget = vmem_limit_bytes // 2         # headroom for compiler-internal scratch
    max_rows = max(1, budget // per_row)

    if B <= granule or B <= max_rows:
        bt = B
    else:
        bt = max(granule, (max_rows // granule) * granule)

    # v7x has two TensorCores: keep >= 2 steps on the "parallel" batch axis
    # whenever the batch is large enough to split legally.
    if bt >= B and B > granule:
        half = -(-B // 2)                           # ceil(B / 2)
        cand = -(-half // granule) * granule        # round up to granule
        if cand < B:
            bt = cand
    return bt


def series_decomp(x, kernel_size):
    """Decompose a (B, L, C) series into (residual, moving_mean)."""
    if kernel_size % 2 != 1:
        # PyTorch's series_decomp only yields a shape-compatible residual for
        # odd kernel_size (x - moving_mean fails there for even K as well).
        raise ValueError("series_decomp requires an odd kernel_size")
    B, L, C = x.shape
    pad = (kernel_size - 1) // 2
    Tp = L + 2 * pad
    Lc = L * C

    # Free contiguous view: time axis now maps onto the lane dimension.
    x2 = x.reshape(B, Lc)

    itemsize = jnp.dtype(x.dtype).itemsize
    acc_dtype = jnp.float32 if itemsize < 4 else x.dtype

    # Generation-aware VMEM limit: ~half physical capacity
    # (v5e/v6e: 64 MiB of 128 MiB; v7x: 32 MiB of 64 MiB).
    try:
        vmem_cap = int(pltpu.get_tpu_info().vmem_capacity_bytes)
    except Exception:
        vmem_cap = 64 * 1024 * 1024
    vmem_limit = int(min(max(vmem_cap // 2, 32 << 20), 96 << 20))

    bt = _pick_block_rows(B, Lc, Tp * C, itemsize, vmem_limit)
    grid = (pl.cdiv(B, bt),)  # ragged last block: OOB rows padded / writes clipped

    kernel = functools.partial(
        _decomp_kernel, kernel_size=kernel_size, pad=pad, C=C, L=L)

    res2, mean2 = pl.pallas_call(
        kernel,
        out_shape=(
            jax.ShapeDtypeStruct((B, Lc), x.dtype),
            jax.ShapeDtypeStruct((B, Lc), x.dtype),
        ),
        grid_spec=pltpu.PrefetchScalarGridSpec(
            num_scalar_prefetch=0,
            grid=grid,
            in_specs=[pl.BlockSpec((bt, Lc), lambda i: (i, 0))],
            out_specs=[
                pl.BlockSpec((bt, Lc), lambda i: (i, 0)),
                pl.BlockSpec((bt, Lc), lambda i: (i, 0)),
            ],
            scratch_shapes=[pltpu.VMEM((bt, Tp * C), acc_dtype)],
        ),
        compiler_params=pltpu.CompilerParams(
            dimension_semantics=("parallel",),
            vmem_limit_bytes=vmem_limit,
        ),
    )(x2)

    return res2.reshape(B, L, C), mean2.reshape(B, L, C)


def _reference(x, kernel_size):
    """Pure-JAX reference mirroring the PyTorch module."""
    pad = (kernel_size - 1) // 2
    front = jnp.repeat(x[:, 0:1, :], pad, axis=1)
    end = jnp.repeat(x[:, -1:, :], pad, axis=1)
    xp = jnp.concatenate([front, x, end], axis=1)
    L = x.shape[1]
    windows = jnp.stack([xp[:, j:j + L, :] for j in range(kernel_size)], axis=0)
    mean = jnp.mean(windows, axis=0)
    return x - mean, mean


if __name__ == "__main__":
    B, L, C = 2, 16, 4
    kernel_size = 5  # series_decomp(kernel_size) -- no learned params

    key = jax.random.PRNGKey(0)
    x = jax.random.normal(key, (B, L, C), dtype=jnp.float32)

    res, mean = series_decomp(x, kernel_size)
    jax.block_until_ready((res, mean))

    res_ref, mean_ref = _reference(x, kernel_size)
    assert jnp.allclose(res, res_ref, atol=1e-5, rtol=1e-5)
    assert jnp.allclose(mean, mean_ref, atol=1e-5, rtol=1e-5)

    print("KERNEL_OK")
</pallas_src>

<mosaic_0001>
module attributes {stable_mosaic.version = 11 : i64} {
  func.func @_decomp_kernel(%arg0: i32, %arg1: memref<2x64xf32, #tpu.memory_space<vmem>>, %arg2: memref<2x64xf32, #tpu.memory_space<vmem>>, %arg3: memref<2x64xf32, #tpu.memory_space<vmem>>, %arg4: memref<2x80xf32, #tpu.memory_space<vmem>>) attributes {dimension_semantics = [#tpu.dimension_semantics<parallel>], iteration_bounds = array<i64: 1>, scalar_prefetch = 0 : i64, scratch_operands = 1 : i64, tpu.core_type = #tpu.core_type<tc>, window_params = [{transform_indices = @transform_0, window_bounds = array<i64: 2, 64>}, {transform_indices = @transform_1, window_bounds = array<i64: 2, 64>}, {transform_indices = @transform_2, window_bounds = array<i64: 2, 64>}]} {
    %c0 = arith.constant 0 : index
    %c0_0 = arith.constant 0 : index
    %0 = vector.load %arg1[%c0, %c0_0] : memref<2x64xf32, #tpu.memory_space<vmem>>, vector<2x64xf32>
    %c0_1 = arith.constant 0 : index
    %c8 = arith.constant 8 : index
    %1 = vector.load %arg4[%c0_1, %c8] : memref<2x80xf32, #tpu.memory_space<vmem>>, vector<2x64xf32>
    tpu.vector_store %arg4[%c0_1, %c8], %0 {strides = array<i32>} : memref<2x80xf32, #tpu.memory_space<vmem>>, vector<2x64xf32>,
    %2 = vector.extract_strided_slice %0 {offsets = [0, 0], sizes = [2, 4], strides = [1, 1]} : vector<2x64xf32> to vector<2x4xf32>
    %3 = vector.extract_strided_slice %0 {offsets = [0, 60], sizes = [2, 4], strides = [1, 1]} : vector<2x64xf32> to vector<2x4xf32>
    %c0_2 = arith.constant 0 : index
    %c0_3 = arith.constant 0 : index
    %4 = vector.load %arg4[%c0_2, %c0_3] : memref<2x80xf32, #tpu.memory_space<vmem>>, vector<2x4xf32>
    tpu.vector_store %arg4[%c0_2, %c0_3], %2 {strides = array<i32>} : memref<2x80xf32, #tpu.memory_space<vmem>>, vector<2x4xf32>,
    %c0_4 = arith.constant 0 : index
    %c72 = arith.constant 72 : index
    %5 = vector.load %arg4[%c0_4, %c72] : memref<2x80xf32, #tpu.memory_space<vmem>>, vector<2x4xf32>
    tpu.vector_store %arg4[%c0_4, %c72], %3 {strides = array<i32>} : memref<2x80xf32, #tpu.memory_space<vmem>>, vector<2x4xf32>,
    %c0_5 = arith.constant 0 : index
    %c4 = arith.constant 4 : index
    %6 = vector.load %arg4[%c0_5, %c4] : memref<2x80xf32, #tpu.memory_space<vmem>>, vector<2x4xf32>
    tpu.vector_store %arg4[%c0_5, %c4], %2 {strides = array<i32>} : memref<2x80xf32, #tpu.memory_space<vmem>>, vector<2x4xf32>,
    %c0_6 = arith.constant 0 : index
    %c76 = arith.constant 76 : index
    %7 = vector.load %arg4[%c0_6, %c76] : memref<2x80xf32, #tpu.memory_space<vmem>>, vector<2x4xf32>
    tpu.vector_store %arg4[%c0_6, %c76], %3 {strides = array<i32>} : memref<2x80xf32, #tpu.memory_space<vmem>>, vector<2x4xf32>,
    %c0_7 = arith.constant 0 : index
    %c0_8 = arith.constant 0 : index
    %8 = vector.load %arg4[%c0_7, %c0_8] : memref<2x80xf32, #tpu.memory_space<vmem>>, vector<2x80xf32>
    %9 = vector.extract_strided_slice %8 {offsets = [0, 0], sizes = [2, 64], strides = [1, 1]} : vector<2x80xf32> to vector<2x64xf32>
    %10 = vector.extract_strided_slice %8 {offsets = [0, 0], sizes = [2, 76], strides = [1, 1]} : vector<2x80xf32> to vector<2x76xf32>
    %11 = vector.extract_strided_slice %8 {offsets = [0, 4], sizes = [2, 76], strides = [1, 1]} : vector<2x80xf32> to vector<2x76xf32>
    %12 = arith.addf %10, %11 : vector<2x76xf32>
    %13 = vector.extract_strided_slice %12 {offsets = [0, 0], sizes = [2, 68], strides = [1, 1]} : vector<2x76xf32> to vector<2x68xf32>
    %14 = vector.extract_strided_slice %12 {offsets = [0, 8], sizes = [2, 68], strides = [1, 1]} : vector<2x76xf32> to vector<2x68xf32>
    %15 = arith.addf %13, %14 : vector<2x68xf32>
    %16 = vector.extract_strided_slice %15 {offsets = [0, 4], sizes = [2, 64], strides = [1, 1]} : vector<2x68xf32> to vector<2x64xf32>
    %17 = arith.addf %9, %16 : vector<2x64xf32>
    %cst = arith.constant 2.000000e-01 : f32
    %18 = vector.broadcast %cst : f32 to vector<2x64xf32>
    %19 = arith.mulf %17, %18 : vector<2x64xf32>
    %c0_9 = arith.constant 0 : index
    %c0_10 = arith.constant 0 : index
    %20 = vector.load %arg3[%c0_9, %c0_10] : memref<2x64xf32, #tpu.memory_space<vmem>>, vector<2x64xf32>
    tpu.vector_store %arg3[%c0_9, %c0_10], %19 {strides = array<i32>} : memref<2x64xf32, #tpu.memory_space<vmem>>, vector<2x64xf32>,
    %21 = arith.subf %0, %19 : vector<2x64xf32>
    %c0_11 = arith.constant 0 : index
    %c0_12 = arith.constant 0 : index
    %22 = vector.load %arg2[%c0_11, %c0_12] : memref<2x64xf32, #tpu.memory_space<vmem>>, vector<2x64xf32>
    tpu.vector_store %arg2[%c0_11, %c0_12], %21 {strides = array<i32>} : memref<2x64xf32, #tpu.memory_space<vmem>>, vector<2x64xf32>,
    return
  }
  func.func @transform_0(%arg0: i32) -> (i32, i32) {
    %c0_i32 = arith.constant 0 : i32
    %c0_i32_0 = arith.constant 0 : i32
    return %arg0, %c0_i32 : i32, i32
  }
  func.func @transform_1(%arg0: i32) -> (i32, i32) {
    %c0_i32 = arith.constant 0 : i32
    %c0_i32_0 = arith.constant 0 : i32
    return %arg0, %c0_i32 : i32, i32
  }
  func.func @transform_2(%arg0: i32) -> (i32, i32) {
    %c0_i32 = arith.constant 0 : i32
    %c0_i32_0 = arith.constant 0 : i32
    return %arg0, %c0_i32 : i32, i32
  }
}

</mosaic_0001>

<llo_original>
// kernel: tpu_custom_call.1
$region0: #{tpu_custom_call.1}
  #allocation0 [shape = 'u32[]', space=smem, size = 0x4, offset = 0x4, fixed_abs, tag = 'smem constant byte address 0x4 - core index']
  #allocation1 [shape = 'u32[144,128]{1,0:T(1,128)}', space=vmem, size = 0x12000, scoped, tag = 'internal scratch']
  #allocation2 [shape = 'f32[2,80]{1,0:T(2,128)}', space=vmem, size = 0x400, scoped, tag = 'scratch operand']
  %s0 = inlined_call_operand.hbm [shape: f32[2,64], index: 0, kind: input, shape index: {}]
  %s1 = inlined_call_operand.hbm [shape: f32[2,64], index: 1, kind: output, shape index: {0}]
  %s2 = inlined_call_operand.hbm [shape: f32[2,64], index: 2, kind: output, shape index: {1}]
  %3 = xla_tuple %s1, %s2
  %s4 = sld [smem:[#allocation0]]
  $region26: #{tpu_custom_call.1} parent=0
    _
  %s6 = ssub.s32 1, %s4
  %s7 = scalar_select 0, %s6, %s4
  $region1: #{tpu_custom_call.1} parent=0
    #allocation3 [shape = 'u8[1024]{0}', space=vmem, size = 0x400, scoped, tag = 'input window, operand 0, single buffered']
    #allocation4 [shape = 's32[1]{0}', space=sflag, size = 0x4, scoped, tag = 'scoped memory for tpu_custom_call.1']
    #allocation5 [shape = 's32[1]{0}', space=sflag, size = 0x4, scoped, tag = 'scoped memory for tpu_custom_call.1']
    #allocation6 [shape = 'u8[1024]{0}', space=vmem, size = 0x400, scoped, tag = 'output window, operand 0, single buffered']
    #allocation7 [shape = 'u8[1024]{0}', space=vmem, size = 0x400, scoped, tag = 'output window, operand 1, single buffered']
    #allocation8 [shape = 's32[1]{0}', space=sflag, size = 0x4, scoped, tag = 'scoped memory for tpu_custom_call.1']
    %8 = vsyncpa [#allocation4], 0
    %9 = vsyncpa [#allocation5], 0
    %10 = vsyncpa [#allocation8], 0
    // Predicated region
    $region2: #{tpu_custom_call.1} parent=1 // pred_check
      _
    $region3: #{tpu_custom_call.1} parent=1 // pred_check_branch
      %12 = sbr.rel (0) target = $region5
    $region4: #{tpu_custom_call.1} parent=1 // pred_region
      %s14 = ssub.s32 32, 32
      %15 = vsyncadd [#allocation4], %s14
      %s17 = sshll.u32 [#allocation3], 4
      %s18 = int_to_ptr.vmem [resolvable:$true] %s17
      %20 = dma.hbm_to_vmem [thread:$0]  %s0, 32, %s18, [#allocation4]
    $region5: #{tpu_custom_call.1} parent=1 // pred_fallthru
      _
    // Predicated region
    $region6: #{tpu_custom_call.1} parent=1 // pred_check
      _
    $region7: #{tpu_custom_call.1} parent=1 // pred_check_branch
      %22 = sbr.rel (0) target = $region9
    $region8: #{tpu_custom_call.1} parent=1 // pred_region
      %23 = dma.done [#allocation4], 32
    $region9: #{tpu_custom_call.1} parent=1 // pred_fallthru
      _
    %v24 = vld [vmem:[#allocation3] sm:$0x3]
    %26 = vrot.lane.b32.xlu0 %v24, 8
    %v27 = vpop.permute.xlu0 %26
    %vm29 = vcmask 582720
    %30 = vst.msk [vmem:[#allocation2] sm:$0x3] %vm29, %v27
    %vm31 = vcmask 25600
    %32 = vst.msk [vmem:[#allocation2] sm:$0x3] %vm31, %v24
    %33 = vrot.lane.b32.xlu0 %v24, 12
    %v34 = vpop.permute.xlu0 %33
    %vm36 = vcmask 616000
    %37 = vst.msk [vmem:[#allocation2] sm:$0x3] %vm36, %v34
    %38 = vrot.lane.b32.xlu0 %v24, 4
    %v39 = vpop.permute.xlu0 %38
    %vm41 = vcmask 58400
    %42 = vst.msk [vmem:[#allocation2] sm:$0x3] %vm41, %v39
    %43 = vrot.lane.b32.xlu0 %v24, 16
    %v44 = vpop.permute.xlu0 %43
    %vm46 = vcmask 648800
    %47 = vst.msk [vmem:[#allocation2] sm:$0x3] %vm46, %v44
    %v48 = vld [vmem:[#allocation2] sm:$0x3]
    %50 = vrot.lane.b32.xlu0 %v48, 124
    %v51 = vpop.permute.xlu0 %50
    %v53 = vadd.f32 %v48, %v51
    %55 = vrot.lane.b32.xlu0 %v53, 120
    %v56 = vpop.permute.xlu0 %55
    %v58 = vadd.f32 %v53, %v56
    %60 = vrot.lane.b32.xlu0 %v58, 124
    %v61 = vpop.permute.xlu0 %60
    %v63 = vadd.f32 %v48, %v61
    %v64 = vmul.f32 %v63, 0.2
    %vm65 = vcmask 517120
    %66 = vst.msk [vmem:[#allocation7] sm:$0x3] %vm65, %v64
    %v67 = vsub.f32 %v24, %v64
    %68 = vst.msk [vmem:[#allocation6] sm:$0x3] %vm65, %v67
    // Predicated region
    $region10: #{tpu_custom_call.1} parent=1 // pred_check
      _
    $region11: #{tpu_custom_call.1} parent=1 // pred_check_branch
      %70 = sbr.rel (0) target = $region13
    $region12: #{tpu_custom_call.1} parent=1 // pred_region
      %s72 = ssub.s32 32, 32
      %73 = vsyncadd [#allocation5], %s72
      %s75 = sshll.u32 [#allocation6], 4
      %s76 = int_to_ptr.vmem [resolvable:$true] %s75
      %78 = dma.vmem_to_hbm [thread:$0]  %s76, 32, %s1, [#allocation5]
    $region13: #{tpu_custom_call.1} parent=1 // pred_fallthru
      _
    // Predicated region
    $region14: #{tpu_custom_call.1} parent=1 // pred_check
      _
    $region15: #{tpu_custom_call.1} parent=1 // pred_check_branch
      %80 = sbr.rel (0) target = $region17
    $region16: #{tpu_custom_call.1} parent=1 // pred_region
      %s82 = ssub.s32 32, 32
      %83 = vsyncadd [#allocation8], %s82
      %s85 = sshll.u32 [#allocation7], 4
      %s86 = int_to_ptr.vmem [resolvable:$true] %s85
      %88 = dma.vmem_to_hbm [thread:$0]  %s86, 32, %s2, [#allocation8]
    $region17: #{tpu_custom_call.1} parent=1 // pred_fallthru
      _
    // Predicated region
    $region18: #{tpu_custom_call.1} parent=1 // pred_check
      _
    $region19: #{tpu_custom_call.1} parent=1 // pred_check_branch
      %90 = sbr.rel (0) target = $region21
    $region20: #{tpu_custom_call.1} parent=1 // pred_region
      %91 = dma.done [#allocation5], 32
    $region21: #{tpu_custom_call.1} parent=1 // pred_fallthru
      _
    // Predicated region
    $region22: #{tpu_custom_call.1} parent=1 // pred_check
      _
    $region23: #{tpu_custom_call.1} parent=1 // pred_check_branch
      %93 = sbr.rel (0) target = $region25
    $region24: #{tpu_custom_call.1} parent=1 // pred_region
      %94 = dma.done [#allocation8], 32
    $region25: #{tpu_custom_call.1} parent=1 // pred_fallthru
      _
    %95 = vsyncpa [#allocation4], 1
    %96 = vsyncpa [#allocation5], 1
    %97 = vsyncpa [#allocation8], 1

</llo_original>
